<compile_context>
chip_gen: v7x
topology: tpu7x:2x2x1
jax: 0.10.0
libtpu: 0.0.40
codegen_flags: <defaults>
</compile_context>

<pallas_src>
import functools

import jax
import jax.numpy as jnp
import numpy as np
from jax.experimental import pallas as pl
from jax.experimental.pallas import tpu as pltpu


def _round_up(n, m):
    return ((n + m - 1) // m) * m


def _tpu_config():
    """(n_tensorcores, vmem_limit_bytes, compute_dtype) from the device kind."""
    kind = ""
    try:
        kind = jax.devices()[0].device_kind.lower()
    except Exception:
        pass
    is_v5e = ("v5 lite" in kind) or ("v5e" in kind) or ("v5lite" in kind)
    is_v7 = "7" in kind
    n_cores = 2 if is_v7 else 1                         # v7x: 2 TCs per chip
    vmem_limit = (48 << 20) if is_v7 else (64 << 20)    # v7x: only 64 MiB VMEM
    # bf16 VALU/MXU are native on v6e/v7x; v5e (and unknown chips) stay f32.
    if kind and not is_v5e and (("v6" in kind) or is_v7):
        compute_dtype = jnp.bfloat16
    else:
        compute_dtype = jnp.float32
    return n_cores, vmem_limit, compute_dtype


def qnet_kernel(x_ref, w1_ref, ew1_ref, w2_ref, b2_ref, out_ref, *,
                a_chunk, num_chunks):
    # x_ref:   (TB, S)      batch tile (f32 or bf16)
    # w1_ref:  (S, H)       fc1 weight (transposed vs PyTorch layout)
    # ew1_ref: (A_pad, H)   precomputed E @ W1 + b1
    # w2_ref:  (1, H)       fc2 weight row
    # b2_ref:  (1,)         fc2 bias, SMEM scalar
    # out_ref: (A_pad, TB)  lane-dense transposed output block (f32)
    tb = x_ref.shape[0]
    hdim = w1_ref.shape[1]
    cdt = ew1_ref.dtype

    # The only GEMM: (TB, S) @ (S, H) on the MXU with f32 accumulation.
    prec = jax.lax.Precision.HIGHEST if x_ref.dtype == jnp.float32 else None
    xw1 = jnp.dot(x_ref[...], w1_ref[...],
                  preferred_element_type=jnp.float32, precision=prec)   # (TB, H)

    # Hoisted out of the A-chunk loop (JAX does not CSE broadcasts/loads):
    xw1_b = xw1.astype(cdt).reshape(1, tb, hdim)     # (1, TB, H), layout no-op
    w2_b = w2_ref[...].astype(cdt).reshape(1, 1, hdim)  # (1, 1, H)
    b2 = b2_ref[0]                                   # scalar from SMEM

    def body(c, carry):
        row0 = pl.multiple_of(c * a_chunk, a_chunk)
        ew1_c = ew1_ref[pl.ds(row0, a_chunk), :]                 # (a_chunk, H)
        act = jnp.maximum(ew1_c.reshape(a_chunk, 1, hdim) + xw1_b, 0)  # VPU
        # fc2 (single output unit): multiply + lane reduce, accumulate in f32.
        q = jnp.sum(act * w2_b, axis=-1, dtype=jnp.float32)     # (a_chunk, TB)
        out_ref[pl.ds(row0, a_chunk), :] = (q + b2).astype(out_ref.dtype)
        return carry

    # Short static trip count -> fully unroll; long -> keep it rolled.
    jax.lax.fori_loop(0, num_chunks, body, 0, unroll=(num_chunks <= 8))


def _vmem_bytes_est(tb, s, h, a_pad, a_chunk, itemsize):
    consts = 2 * (s * h + a_pad * h + h) * itemsize           # W1, EW1, w2 (x2 buf)
    io = 2 * (tb * s * itemsize + a_pad * tb * 4)             # x in, f32 out (x2 buf)
    temps = tb * h * 4 + 3 * a_chunk * tb * h * itemsize      # xw1 + act/prod temps
    return consts + io + temps


def _choose_tile(batch, n_cores, tb_cap):
    """Batch rows per grid step."""
    # Single block covering the whole batch: a full-extent block dim is always
    # legal under the (8,128) rule and needs no host-side padding.
    if batch <= 128 or (batch <= tb_cap and n_cores == 1):
        return batch
    # Multi-tile: tile must be a multiple of 128 so both the x block's sublane
    # dim and the lane-dense (A_pad, tb) output block satisfy the (8,128) rule.
    tb = _round_up(pl.cdiv(batch, n_cores), 128)
    return max(128, min(tb_cap, tb))


def qnet_forward(x, embed_w, w1_pt, b1, w2_pt, b2, *,
                 compute_dtype=None, max_tb=512):
    """Qnet forward (default actions=None path). x: (B, S) f32 -> (B, A) f32.

    Parameters are in PyTorch layout: embed_w (A,S), w1_pt (H,S), b1 (H,),
    w2_pt (1,H), b2 (1,).
    """
    # TODO(synk): the `actions is not None` branch (per-row embedding gather)
    # is not implemented in-kernel; only the default actions=None path is.
    B, S = x.shape
    A = embed_w.shape[0]
    H = w1_pt.shape[0]

    n_cores, vmem_limit, auto_dtype = _tpu_config()
    cdt = auto_dtype if compute_dtype is None else compute_dtype

    # Algebraic hoist (f32, full precision): fold embedding table and fc1 bias
    # into one (A, H) table, computed once per parameter set.
    w1 = w1_pt.T.astype(jnp.float32)                                   # (S, H)
    ew1 = (jnp.dot(embed_w.astype(jnp.float32), w1,
                   precision=jax.lax.Precision.HIGHEST)
           + b1[None, :].astype(jnp.float32))                          # (A, H)

    a_chunk = 8
    a_pad = _round_up(max(A, a_chunk), a_chunk)
    if a_pad != A:
        ew1 = jnp.pad(ew1, ((0, a_pad - A), (0, 0)))   # extra rows -> discarded
    num_chunks = a_pad // a_chunk

    x_c = x.astype(cdt)
    w1_c = w1.astype(cdt)
    ew1_c = ew1.astype(cdt)
    w2_c = w2_pt.reshape(1, H).astype(cdt)
    b2_s = b2.reshape(1).astype(jnp.float32)

    # Tile cap from the per-generation VMEM budget (matters on v7x's 64 MiB).
    itemsize = jnp.dtype(cdt).itemsize
    budget = int(vmem_limit * 0.75)
    tb_cap = max(128, _round_up(max_tb, 128))
    while tb_cap > 128 and _vmem_bytes_est(tb_cap, S, H, a_pad, a_chunk,
                                           itemsize) > budget:
        tb_cap -= 128

    tb = _choose_tile(B, n_cores, tb_cap)
    num_tiles = pl.cdiv(B, tb)    # ragged tail block is masked by Pallas

    kernel = functools.partial(qnet_kernel, a_chunk=a_chunk,
                               num_chunks=num_chunks)
    out_t = pl.pallas_call(
        kernel,
        out_shape=jax.ShapeDtypeStruct((a_pad, B), jnp.float32),
        grid=(num_tiles,),
        in_specs=[
            pl.BlockSpec((tb, S), lambda i: (i, 0)),       # x tile (pipelined)
            pl.BlockSpec((S, H), lambda i: (0, 0)),        # W1  (grid-invariant)
            pl.BlockSpec((a_pad, H), lambda i: (0, 0)),    # EW1 (grid-invariant)
            pl.BlockSpec((1, H), lambda i: (0, 0)),        # fc2 weight row
            pl.BlockSpec(memory_space=pltpu.MemorySpace.SMEM),  # fc2 bias scalar
        ],
        out_specs=pl.BlockSpec((a_pad, tb), lambda i: (0, i)),
        compiler_params=pltpu.CompilerParams(
            dimension_semantics=("parallel",),
            vmem_limit_bytes=vmem_limit),
    )(x_c, w1_c, ew1_c, w2_c, b2_s)

    # (A_pad, B) lane-dense kernel layout -> module's (B, A).
    return out_t[:A, :].T


def init_params(key, state_dim, hidden_dim, action_dim):
    """Deterministic parameter init mirroring the PyTorch module's shapes."""
    k_e, k_w1, k_b1, k_w2, k_b2 = jax.random.split(key, 5)
    embed_w = jax.random.normal(k_e, (action_dim, state_dim), jnp.float32)
    lim1 = 1.0 / np.sqrt(state_dim)
    w1_pt = jax.random.uniform(k_w1, (hidden_dim, state_dim), jnp.float32,
                               -lim1, lim1)            # PyTorch (out, in)
    b1 = jax.random.uniform(k_b1, (hidden_dim,), jnp.float32, -lim1, lim1)
    lim2 = 1.0 / np.sqrt(hidden_dim)
    w2_pt = jax.random.uniform(k_w2, (1, hidden_dim), jnp.float32, -lim2, lim2)
    b2 = jax.random.uniform(k_b2, (1,), jnp.float32, -lim2, lim2)
    return embed_w, w1_pt, b1, w2_pt, b2


def qnet_reference(x, embed_w, w1_pt, b1, w2_pt, b2):
    """Plain-JAX reference matching the PyTorch forward (actions=None)."""
    hp = jax.lax.Precision.HIGHEST
    z = x[:, None, :] + embed_w[None, :, :]            # (B, A, S)
    h = jnp.maximum(jnp.einsum("bas,hs->bah", z, w1_pt, precision=hp) + b1, 0.0)
    return jnp.einsum("bah,oh->bao", h, w2_pt, precision=hp)[..., 0] + b2[0]


if __name__ == "__main__":
    key = jax.random.PRNGKey(0)
    k_x, k_p, k_x2, k_p2 = jax.random.split(key, 4)

    # Check 1: tiny shapes, f32 compute, single batch tile.
    batch, state_dim, hidden_dim, action_dim = 2, 16, 32, 8
    x = jax.random.normal(k_x, (batch, state_dim), jnp.float32)
    params = init_params(k_p, state_dim, hidden_dim, action_dim)
    out = jax.block_until_ready(
        qnet_forward(x, *params, compute_dtype=jnp.float32))
    ref = qnet_reference(x, *params)
    np.testing.assert_allclose(np.asarray(out), np.asarray(ref),
                               rtol=1e-5, atol=2e-5)

    # Check 2: multi-tile grid with a ragged tail (B=260, tb=128) and a
    # non-multiple-of-8 action dim -> exercises masked tail blocks, the
    # lane-dense transposed output and padded EW1 rows. Still f32, tight tol.
    batch2, action_dim2 = 260, 5
    x2 = jax.random.normal(k_x2, (batch2, state_dim), jnp.float32)
    params2 = init_params(k_p2, state_dim, hidden_dim, action_dim2)
    out2 = jax.block_until_ready(
        qnet_forward(x2, *params2, compute_dtype=jnp.float32, max_tb=128))
    ref2 = qnet_reference(x2, *params2)
    np.testing.assert_allclose(np.asarray(out2), np.asarray(ref2),
                               rtol=1e-5, atol=2e-5)

    # Check 3: auto compute dtype (bf16 on v6e/v7x, f32 on v5e) -> loose tol.
    out3 = jax.block_until_ready(qnet_forward(x, *params))
    np.testing.assert_allclose(np.asarray(out3), np.asarray(ref),
                               rtol=5e-2, atol=5e-2)

    print("KERNEL_OK")
</pallas_src>

<mosaic_0001>
module attributes {stable_mosaic.version = 11 : i64} {
  func.func @qnet_kernel(%arg0: i32, %arg1: memref<2x16xf32, #tpu.memory_space<vmem>>, %arg2: memref<16x32xf32, #tpu.memory_space<vmem>>, %arg3: memref<8x32xf32, #tpu.memory_space<vmem>>, %arg4: memref<1x32xf32, #tpu.memory_space<vmem>>, %arg5: memref<1xf32, #tpu.memory_space<smem>>, %arg6: memref<8x2xf32, #tpu.memory_space<vmem>>) attributes {dimension_semantics = [#tpu.dimension_semantics<parallel>], iteration_bounds = array<i64: 1>, scalar_prefetch = 0 : i64, scratch_operands = 0 : i64, tpu.core_type = #tpu.core_type<tc>, window_params = [{transform_indices = @transform_0, window_bounds = array<i64: 2, 16>}, {pipeline_mode = #tpu.pipeline_mode<synchronous>, transform_indices = @transform_1, window_bounds = array<i64: 16, 32>}, {pipeline_mode = #tpu.pipeline_mode<synchronous>, transform_indices = @transform_2, window_bounds = array<i64: 8, 32>}, {pipeline_mode = #tpu.pipeline_mode<synchronous>, transform_indices = @transform_3, window_bounds = array<i64: 1, 32>}, {transform_indices = @transform_4, window_bounds = array<i64: 1>}, {transform_indices = @transform_5, window_bounds = array<i64: 8, 2>}]} {
    %c0 = arith.constant 0 : index
    %c0_0 = arith.constant 0 : index
    %0 = vector.load %arg1[%c0, %c0_0] : memref<2x16xf32, #tpu.memory_space<vmem>>, vector<2x16xf32>
    %c0_1 = arith.constant 0 : index
    %c0_2 = arith.constant 0 : index
    %1 = vector.load %arg2[%c0_1, %c0_2] : memref<16x32xf32, #tpu.memory_space<vmem>>, vector<16x32xf32>
    %cst = arith.constant dense<0.000000e+00> : vector<2x32xf32>
    %2 = tpu.matmul %0, %1, %cst {dimension_numbers = #tpu.dot_dimension_numbers<[1], [0], [0], [1], [0, 0, 1, 1], [], []>, precision = #tpu.contract_precision<fp32>} : vector<2x16xf32>, vector<16x32xf32>, vector<2x32xf32> -> vector<2x32xf32>
    %3 = vector.shape_cast %2 : vector<2x32xf32> to vector<1x2x32xf32>
    %c0_3 = arith.constant 0 : index
    %c0_4 = arith.constant 0 : index
    %4 = vector.load %arg4[%c0_3, %c0_4] : memref<1x32xf32, #tpu.memory_space<vmem>>, vector<1x32xf32>
    %5 = vector.shape_cast %4 : vector<1x32xf32> to vector<1x1x32xf32>
    %c0_5 = arith.constant 0 : index
    %6 = memref.load %arg5[%c0_5] : memref<1xf32, #tpu.memory_space<smem>>
    %c0_i32 = arith.constant 0 : i32
    %c8_i32 = arith.constant 8 : i32
    %7 = arith.muli %c0_i32, %c8_i32 : i32
    %8 = tpu.assume_multiple %7, 8 : i32
    %9 = arith.index_cast %8 : i32 to index
    %c0_6 = arith.constant 0 : index
    %10 = vector.load %arg3[%9, %c0_6] : memref<8x32xf32, #tpu.memory_space<vmem>>, vector<8x32xf32>
    %11 = vector.shape_cast %10 : vector<8x32xf32> to vector<8x1x32xf32>
    %12 = vector.broadcast %11 : vector<8x1x32xf32> to vector<8x2x32xf32>
    %13 = vector.broadcast %3 : vector<1x2x32xf32> to vector<8x2x32xf32>
    %14 = arith.addf %12, %13 : vector<8x2x32xf32>
    %cst_7 = arith.constant 0.000000e+00 : f32
    %15 = vector.broadcast %cst_7 : f32 to vector<8x2x32xf32>
    %16 = arith.maximumf %14, %15 : vector<8x2x32xf32>
    %17 = vector.broadcast %5 : vector<1x1x32xf32> to vector<8x2x32xf32>
    %18 = arith.mulf %16, %17 : vector<8x2x32xf32>
    %cst_8 = arith.constant dense<0.000000e+00> : vector<8x2xf32>
    %19 = vector.multi_reduction <add>, %18, %cst_8 [2] : vector<8x2x32xf32> to vector<8x2xf32>
    %20 = vector.broadcast %6 : f32 to vector<8x2xf32>
    %21 = arith.addf %19, %20 : vector<8x2xf32>
    %22 = arith.index_cast %8 : i32 to index
    %c0_9 = arith.constant 0 : index
    %23 = vector.load %arg6[%22, %c0_9] : memref<8x2xf32, #tpu.memory_space<vmem>>, vector<8x2xf32>
    tpu.vector_store %arg6[%22, %c0_9], %21 {strides = array<i32>} : memref<8x2xf32, #tpu.memory_space<vmem>>, vector<8x2xf32>,
    %c1_i32 = arith.constant 1 : i32
    return
  }
  func.func @transform_0(%arg0: i32) -> (i32, i32) {
    %c0_i32 = arith.constant 0 : i32
    %c0_i32_0 = arith.constant 0 : i32
    return %arg0, %c0_i32 : i32, i32
  }
  func.func @transform_1(%arg0: i32) -> (i32, i32) {
    %c0_i32 = arith.constant 0 : i32
    %c0_i32_0 = arith.constant 0 : i32
    %c0_i32_1 = arith.constant 0 : i32
    return %c0_i32, %c0_i32_0 : i32, i32
  }
  func.func @transform_2(%arg0: i32) -> (i32, i32) {
    %c0_i32 = arith.constant 0 : i32
    %c0_i32_0 = arith.constant 0 : i32
    %c0_i32_1 = arith.constant 0 : i32
    return %c0_i32, %c0_i32_0 : i32, i32
  }
  func.func @transform_3(%arg0: i32) -> (i32, i32) {
    %c0_i32 = arith.constant 0 : i32
    %c0_i32_0 = arith.constant 0 : i32
    %c0_i32_1 = arith.constant 0 : i32
    return %c0_i32, %c0_i32_0 : i32, i32
  }
  func.func @transform_4(%arg0: i32) -> i32 {
    %c0_i32 = arith.constant 0 : i32
    %c0_i32_0 = arith.constant 0 : i32
    return %c0_i32 : i32
  }
  func.func @transform_5(%arg0: i32) -> (i32, i32) {
    %c0_i32 = arith.constant 0 : i32
    %c0_i32_0 = arith.constant 0 : i32
    return %c0_i32, %arg0 : i32, i32
  }
}

</mosaic_0001>

<llo_original>
// kernel: tpu_custom_call.1
$region0: #{tpu_custom_call.1}
  #allocation0 [shape = 'u32[]', space=smem, size = 0x4, offset = 0x4, fixed_abs, tag = 'smem constant byte address 0x4 - core index']
  #allocation1 [shape = 'u32[144,128]{1,0:T(1,128)}', space=vmem, size = 0x12000, scoped, tag = 'internal scratch']
  #allocation2 [shape = 'f32[1]{0:T(128)S(6)}', space=smem, size = 0x200, scoped, tag = 'scoped memory for tpu_custom_call.1']
  %s0 = inlined_call_operand.hbm [shape: f32[2,16], index: 0, kind: input, shape index: {}]
  %s1 = inlined_call_operand.hbm [shape: f32[16,32], index: 1, kind: input, shape index: {}]
  %s2 = inlined_call_operand.hbm [shape: f32[8,32], index: 2, kind: input, shape index: {}]
  %s3 = inlined_call_operand.hbm [shape: f32[1,32], index: 3, kind: input, shape index: {}]
  %s4 = inlined_call_operand.<no memory space> [shape: f32[1], index: 4, kind: input, shape index: {}]
  %s5 = inlined_call_operand.hbm [shape: f32[8,2], index: 5, kind: output, shape index: {}]
  %s6 = sld [smem:[#allocation0]]
  $region46: #{tpu_custom_call.1} parent=0
    _
  %s8 = ssub.s32 1, %s6
  %s9 = scalar_select 0, %s8, %s6
  %10 = sst [smem:[#allocation2]] %s4
  $region1: #{tpu_custom_call.1} parent=0
    #allocation3 [shape = 'u8[1024]{0}', space=vmem, size = 0x400, scoped, tag = 'input window, operand 0, single buffered']
    #allocation4 [shape = 's32[1]{0}', space=sflag, size = 0x4, scoped, tag = 'scoped memory for tpu_custom_call.1']
    #allocation5 [shape = 's32[1]{0}', space=sflag, size = 0x4, scoped, tag = 'scoped memory for tpu_custom_call.1']
    #allocation6 [shape = 'u8[8192]{0}', space=vmem, size = 0x2000, scoped, tag = 'input window, operand 1, single buffered']
    #allocation7 [shape = 's32[1]{0}', space=sflag, size = 0x4, scoped, tag = 'scoped memory for tpu_custom_call.1']
    #allocation8 [shape = 'u8[4096]{0}', space=vmem, size = 0x1000, scoped, tag = 'input window, operand 2, single buffered']
    #allocation9 [shape = 'u8[512]{0}', space=vmem, size = 0x400, scoped, tag = 'input window, operand 3, single buffered']
    #allocation10 [shape = 's32[1]{0}', space=sflag, size = 0x4, scoped, tag = 'scoped memory for tpu_custom_call.1']
    #allocation11 [shape = 'u8[4096]{0}', space=vmem, size = 0x1000, scoped, tag = 'output window, operand 0, single buffered']
    %11 = vsyncpa [#allocation4], 0
    %12 = vsyncpa [#allocation7], 0
    %13 = vsyncpa [#allocation10], 0
    %14 = vsyncpa [#allocation5], 0
    // Predicated region
    $region2: #{tpu_custom_call.1} parent=1 // pred_check
      _
    $region3: #{tpu_custom_call.1} parent=1 // pred_check_branch
      %16 = sbr.rel (0) target = $region5
    $region4: #{tpu_custom_call.1} parent=1 // pred_region
      %s18 = ssub.s32 32, 32
      %19 = vsyncadd [#allocation4], %s18
      %s21 = sshll.u32 [#allocation3], 4
      %s22 = int_to_ptr.vmem [resolvable:$true] %s21
      %24 = dma.hbm_to_vmem [thread:$0]  %s0, 32, %s22, [#allocation4]
    $region5: #{tpu_custom_call.1} parent=1 // pred_fallthru
      _
    // Predicated region
    $region6: #{tpu_custom_call.1} parent=1 // pred_check
      _
    $region7: #{tpu_custom_call.1} parent=1 // pred_check_branch
      %26 = sbr.rel (0) target = $region9
    $region8: #{tpu_custom_call.1} parent=1 // pred_region
      %s28 = ssub.s32 256, 256
      %29 = vsyncadd [#allocation7], %s28
      %s30 = sshll.u32 [#allocation6], 4
      %s31 = int_to_ptr.vmem [resolvable:$true] %s30
      %36 = dma.hbm_to_vmem [thread:$0]  %s1, 256, %s31, [#allocation7], 128, 128, 8
    $region9: #{tpu_custom_call.1} parent=1 // pred_fallthru
      _
    // Predicated region
    $region10: #{tpu_custom_call.1} parent=1 // pred_check
      _
    $region11: #{tpu_custom_call.1} parent=1 // pred_check_branch
      %38 = sbr.rel (0) target = $region13
    $region12: #{tpu_custom_call.1} parent=1 // pred_region
      %s40 = ssub.s32 128, 128
      %41 = vsyncadd [#allocation7], %s40
      %s43 = sshll.u32 [#allocation8], 4
      %s44 = int_to_ptr.vmem [resolvable:$true] %s43
      %46 = dma.hbm_to_vmem [thread:$0]  %s2, 128, %s44, [#allocation7]
    $region13: #{tpu_custom_call.1} parent=1 // pred_fallthru
      _
    // Predicated region
    $region14: #{tpu_custom_call.1} parent=1 // pred_check
      _
    $region15: #{tpu_custom_call.1} parent=1 // pred_check_branch
      %48 = sbr.rel (0) target = $region17
    $region16: #{tpu_custom_call.1} parent=1 // pred_region
      %s50 = ssub.s32 16, 16
      %51 = vsyncadd [#allocation10], %s50
      %s53 = sshll.u32 [#allocation9], 4
      %s54 = int_to_ptr.vmem [resolvable:$true] %s53
      %56 = dma.hbm_to_vmem [thread:$0]  %s3, 16, %s54, [#allocation10]
    $region17: #{tpu_custom_call.1} parent=1 // pred_fallthru
      _
    // Predicated region
    $region18: #{tpu_custom_call.1} parent=1 // pred_check
      _
    $region19: #{tpu_custom_call.1} parent=1 // pred_check_branch
      %58 = sbr.rel (0) target = $region21
    $region20: #{tpu_custom_call.1} parent=1 // pred_region
      _
    $region21: #{tpu_custom_call.1} parent=1 // pred_fallthru
      _
    // Predicated region
    $region22: #{tpu_custom_call.1} parent=1 // pred_check
      _
    $region23: #{tpu_custom_call.1} parent=1 // pred_check_branch
      %60 = sbr.rel (0) target = $region25
    $region24: #{tpu_custom_call.1} parent=1 // pred_region
      %61 = dma.done [#allocation4], 32
    $region25: #{tpu_custom_call.1} parent=1 // pred_fallthru
      _
    // Predicated region
    $region26: #{tpu_custom_call.1} parent=1 // pred_check
      _
    $region27: #{tpu_custom_call.1} parent=1 // pred_check_branch
      %63 = sbr.rel (0) target = $region29
    $region28: #{tpu_custom_call.1} parent=1 // pred_region
      %64 = dma.done [#allocation7], 256
    $region29: #{tpu_custom_call.1} parent=1 // pred_fallthru
      _
    // Predicated region
    $region30: #{tpu_custom_call.1} parent=1 // pred_check
      _
    $region31: #{tpu_custom_call.1} parent=1 // pred_check_branch
      %66 = sbr.rel (0) target = $region33
    $region32: #{tpu_custom_call.1} parent=1 // pred_region
      %67 = dma.done [#allocation7], 128
    $region33: #{tpu_custom_call.1} parent=1 // pred_fallthru
      _
    // Predicated region
    $region34: #{tpu_custom_call.1} parent=1 // pred_check
      _
    $region35: #{tpu_custom_call.1} parent=1 // pred_check_branch
      %69 = sbr.rel (0) target = $region37
    $region36: #{tpu_custom_call.1} parent=1 // pred_region
      %70 = dma.done [#allocation10], 16
    $region37: #{tpu_custom_call.1} parent=1 // pred_fallthru
      _
    %v71 = vld [vmem:[#allocation3] sm:$0x3]
    %v72 = vld [vmem:[#allocation6] sm:$0xff]
    %v73 = vld [vmem:[#allocation6 + $0x8] sm:$0xff]
    %vm74 = vcmask 130048
    %v76 = vsel %vm74, %v71, 0
    %78 = vmatprep.subr.mxu0 0.0
    %v79 = vand.u32 %v72, 4294901760
    %80 = vmatpush1.msra.mxu0 %v79
    %81 = vmatprep.subr.mxu0 0.0
    %v82 = vand.u32 %v73, 4294901760
    %83 = vmatpush1.msra.mxu0 %v82
    %84 = vmatprep.subr.mxu0 0.0
    %85 = vmatpush1.msra.mxu0 0.0
    %86 = vmatprep.subr.mxu0 0.0
    %87 = vmatpush1.msra.mxu0 0.0
    %88 = vmatprep.subr.mxu0 0.0
    %89 = vmatpush1.msra.mxu0 0.0
    %90 = vmatprep.subr.mxu0 0.0
    %91 = vmatpush1.msra.mxu0 0.0
    %92 = vmatprep.subr.mxu0 0.0
    %93 = vmatpush1.msra.mxu0 0.0
    %94 = vmatprep.subr.mxu0 0.0
    %95 = vmatpush1.msra.mxu0 0.0
    %96 = vmatprep.subr.mxu0 0.0
    %97 = vmatpush1.msra.mxu0 0.0
    %98 = vmatprep.subr.mxu0 0.0
    %99 = vmatpush1.msra.mxu0 0.0
    %100 = vmatprep.subr.mxu0 0.0
    %101 = vmatpush1.msra.mxu0 0.0
    %102 = vmatprep.subr.mxu0 0.0
    %103 = vmatpush1.msra.mxu0 0.0
    %104 = vmatprep.subr.mxu0 0.0
    %105 = vmatpush1.msra.mxu0 0.0
    %106 = vmatprep.subr.mxu0 0.0
    %107 = vmatpush1.msra.mxu0 0.0
    %108 = vmatprep.subr.mxu0 0.0
    %109 = vmatpush1.msra.mxu0 0.0
    %110 = vmatprep.subr.mxu0 0.0
    %111 = vmatpush1.msra.mxu0 0.0
    %112 = vmatprep.subr.mxu0 0.0
    %113 = vmatpush1.msra.mxu0 0.0
    %114 = vmatprep.subr.mxu0 0.0
    %115 = vmatpush1.msra.mxu0 0.0
    %116 = vmatprep.subr.mxu0 0.0
    %117 = vmatpush1.msra.mxu0 0.0
    %118 = vmatprep.subr.mxu0 0.0
    %119 = vmatpush1.msra.mxu0 0.0
    %120 = vmatprep.subr.mxu0 0.0
    %121 = vmatpush1.msra.mxu0 0.0
    %122 = vmatprep.subr.mxu0 0.0
    %123 = vmatpush1.msra.mxu0 0.0
    %124 = vmatprep.subr.mxu0 0.0
    %125 = vmatpush1.msra.mxu0 0.0
    %126 = vmatprep.subr.mxu0 0.0
    %127 = vmatpush1.msra.mxu0 0.0
    %128 = vmatprep.subr.mxu0 0.0
    %129 = vmatpush1.msra.mxu0 0.0
    %130 = vmatprep.subr.mxu0 0.0
    %131 = vmatpush1.msra.mxu0 0.0
    %132 = vmatprep.subr.mxu0 0.0
    %133 = vmatpush1.msra.mxu0 0.0
    %134 = vmatprep.subr.mxu0 0.0
    %135 = vmatpush1.msra.mxu0 0.0
    %136 = vmatprep.subr.mxu0 0.0
    %137 = vmatpush1.msra.mxu0 0.0
    %138 = vmatprep.subr.mxu0 0.0
    %139 = vmatpush1.msra.mxu0 0.0
    %140 = vmatprep.subr.mxu0 0.0
    %141 = vmatpush1.msra.mxu0 0.0
    %142 = vmatprep.subr.mxu0 0.0
    %143 = vmatpush1.msra.mxu0 0.0
    %144 = vmatprep.mubr.f32.mxu0 0.0
    %v145 = vand.u32 %v76, 4294901760
    %v146 = vsub.f32 %v76, %v145
    %v147 = vand.u32 %v146, 4294901760
    %v148 = vsub.f32 %v146, %v147
    %v149 = vand.u32 %v148, 4294901760
    %150 = vmatmul.mubr.f32.gmra.mrb[0].mxu0 %v149
    %v151 = vpop.f32.mrb[0].mxu0
    %v152 = vadd.f32 0.0, %v151
    %v153 = vpop.f32.mrb[0].mxu0
    %154 = vdwg.mxu0
    %155 = vmatprep.subr.mxu0 0.0
    %v156 = vand.u32 %v72, 4294901760
    %v157 = vsub.f32 %v72, %v156
    %v158 = vand.u32 %v157, 4294901760
    %v159 = vsub.f32 %v157, %v158
    %v160 = vand.u32 %v159, 4294901760
    %161 = vmatpush1.msra.mxu0 %v160
    %162 = vmatprep.subr.mxu0 0.0
    %v163 = vand.u32 %v73, 4294901760
    %v164 = vsub.f32 %v73, %v163
    %v165 = vand.u32 %v164, 4294901760
    %v166 = vsub.f32 %v164, %v165
    %v167 = vand.u32 %v166, 4294901760
    %168 = vmatpush1.msra.mxu0 %v167
    %169 = vmatprep.subr.mxu0 0.0
    %170 = vmatpush1.msra.mxu0 0.0
    %171 = vmatprep.subr.mxu0 0.0
    %172 = vmatpush1.msra.mxu0 0.0
    %173 = vmatprep.subr.mxu0 0.0
    %174 = vmatpush1.msra.mxu0 0.0
    %175 = vmatprep.subr.mxu0 0.0
    %176 = vmatpush1.msra.mxu0 0.0
    %177 = vmatprep.subr.mxu0 0.0
    %178 = vmatpush1.msra.mxu0 0.0
    %179 = vmatprep.subr.mxu0 0.0
    %180 = vmatpush1.msra.mxu0 0.0
    %181 = vmatprep.subr.mxu0 0.0
    %182 = vmatpush1.msra.mxu0 0.0
    %183 = vmatprep.subr.mxu0 0.0
    %184 = vmatpush1.msra.mxu0 0.0
    %185 = vmatprep.subr.mxu0 0.0
    %186 = vmatpush1.msra.mxu0 0.0
    %187 = vmatprep.subr.mxu0 0.0
    %188 = vmatpush1.msra.mxu0 0.0
    %189 = vmatprep.subr.mxu0 0.0
    %190 = vmatpush1.msra.mxu0 0.0
    %191 = vmatprep.subr.mxu0 0.0
    %192 = vmatpush1.msra.mxu0 0.0
    %193 = vmatprep.subr.mxu0 0.0
    %194 = vmatpush1.msra.mxu0 0.0
    %195 = vmatprep.subr.mxu0 0.0
    %196 = vmatpush1.msra.mxu0 0.0
    %197 = vmatprep.subr.mxu0 0.0
    %198 = vmatpush1.msra.mxu0 0.0
    %199 = vmatprep.subr.mxu0 0.0
    %200 = vmatpush1.msra.mxu0 0.0
    %201 = vmatprep.subr.mxu0 0.0
    %202 = vmatpush1.msra.mxu0 0.0
    %203 = vmatprep.subr.mxu0 0.0
    %204 = vmatpush1.msra.mxu0 0.0
    %205 = vmatprep.subr.mxu0 0.0
    %206 = vmatpush1.msra.mxu0 0.0
    %207 = vmatprep.subr.mxu0 0.0
    %208 = vmatpush1.msra.mxu0 0.0
    %209 = vmatprep.subr.mxu0 0.0
    %210 = vmatpush1.msra.mxu0 0.0
    %211 = vmatprep.subr.mxu0 0.0
    %212 = vmatpush1.msra.mxu0 0.0
    %213 = vmatprep.subr.mxu0 0.0
    %214 = vmatpush1.msra.mxu0 0.0
    %215 = vmatprep.subr.mxu0 0.0
    %216 = vmatpush1.msra.mxu0 0.0
    %217 = vmatprep.subr.mxu0 0.0
    %218 = vmatpush1.msra.mxu0 0.0
    %219 = vmatprep.subr.mxu0 0.0
    %220 = vmatpush1.msra.mxu0 0.0
    %221 = vmatprep.subr.mxu0 0.0
    %222 = vmatpush1.msra.mxu0 0.0
    %223 = vmatprep.subr.mxu0 0.0
    %224 = vmatpush1.msra.mxu0 0.0
    %225 = vmatprep.subr.mxu0 0.0
    %226 = vmatpush1.msra.mxu0 0.0
    %227 = vmatprep.subr.mxu0 0.0
    %228 = vmatpush1.msra.mxu0 0.0
    %229 = vmatprep.mubr.f32.mxu0 0.0
    %v230 = vand.u32 %v76, 4294901760
    %231 = vmatmul.mubr.f32.gmra.mrb[0].mxu0 %v230
    %v232 = vpop.f32.mrb[0].mxu0
    %v233 = vadd.f32 %v152, %v232
    %v234 = vpop.f32.mrb[0].mxu0
    %235 = vdwg.mxu0
    %236 = vmatprep.subr.mxu0 0.0
    %v237 = vand.u32 %v72, 4294901760
    %v238 = vsub.f32 %v72, %v237
    %239 = vmatpush1.msra.mxu0 %v238
    %240 = vmatprep.subr.mxu0 0.0
    %v241 = vand.u32 %v73, 4294901760
    %v242 = vsub.f32 %v73, %v241
    %243 = vmatpush1.msra.mxu0 %v242
    %244 = vmatprep.subr.mxu0 0.0
    %245 = vmatpush1.msra.mxu0 0.0
    %246 = vmatprep.subr.mxu0 0.0
    %247 = vmatpush1.msra.mxu0 0.0
    %248 = vmatprep.subr.mxu0 0.0
    %249 = vmatpush1.msra.mxu0 0.0
    %250 = vmatprep.subr.mxu0 0.0
    %251 = vmatpush1.msra.mxu0 0.0
    %252 = vmatprep.subr.mxu0 0.0
    %253 = vmatpush1.msra.mxu0 0.0
    %254 = vmatprep.subr.mxu0 0.0
    %255 = vmatpush1.msra.mxu0 0.0
    %256 = vmatprep.subr.mxu0 0.0
    %257 = vmatpush1.msra.mxu0 0.0
    %258 = vmatprep.subr.mxu0 0.0
    %259 = vmatpush1.msra.mxu0 0.0
    %260 = vmatprep.subr.mxu0 0.0
    %261 = vmatpush1.msra.mxu0 0.0
    %262 = vmatprep.subr.mxu0 0.0
    %263 = vmatpush1.msra.mxu0 0.0
    %264 = vmatprep.subr.mxu0 0.0
    %265 = vmatpush1.msra.mxu0 0.0
    %266 = vmatprep.subr.mxu0 0.0
    %267 = vmatpush1.msra.mxu0 0.0
    %268 = vmatprep.subr.mxu0 0.0
    %269 = vmatpush1.msra.mxu0 0.0
    %270 = vmatprep.subr.mxu0 0.0
    %271 = vmatpush1.msra.mxu0 0.0
    %272 = vmatprep.subr.mxu0 0.0
    %273 = vmatpush1.msra.mxu0 0.0
    %274 = vmatprep.subr.mxu0 0.0
    %275 = vmatpush1.msra.mxu0 0.0
    %276 = vmatprep.subr.mxu0 0.0
    %277 = vmatpush1.msra.mxu0 0.0
    %278 = vmatprep.subr.mxu0 0.0
    %279 = vmatpush1.msra.mxu0 0.0
    %280 = vmatprep.subr.mxu0 0.0
    %281 = vmatpush1.msra.mxu0 0.0
    %282 = vmatprep.subr.mxu0 0.0
    %283 = vmatpush1.msra.mxu0 0.0
    %284 = vmatprep.subr.mxu0 0.0
    %285 = vmatpush1.msra.mxu0 0.0
    %286 = vmatprep.subr.mxu0 0.0
    %287 = vmatpush1.msra.mxu0 0.0
    %288 = vmatprep.subr.mxu0 0.0
    %289 = vmatpush1.msra.mxu0 0.0
    %290 = vmatprep.subr.mxu0 0.0
    %291 = vmatpush1.msra.mxu0 0.0
    %292 = vmatprep.subr.mxu0 0.0
    %293 = vmatpush1.msra.mxu0 0.0
    %294 = vmatprep.subr.mxu0 0.0
    %295 = vmatpush1.msra.mxu0 0.0
    %296 = vmatprep.subr.mxu0 0.0
    %297 = vmatpush1.msra.mxu0 0.0
    %298 = vmatprep.subr.mxu0 0.0
    %299 = vmatpush1.msra.mxu0 0.0
    %300 = vmatprep.subr.mxu0 0.0
    %301 = vmatpush1.msra.mxu0 0.0
    %302 = vmatprep.subr.mxu0 0.0
    %303 = vmatpush1.msra.mxu0 0.0
    %304 = vmatprep.mubr.f32.mxu0 0.0
    %v305 = vand.u32 %v76, 4294901760
    %v306 = vsub.f32 %v76, %v305
    %307 = vmatmul.mubr.f32.gmra.mrb[0].mxu0 %v306
    %v308 = vpop.f32.mrb[0].mxu0
    %v309 = vadd.f32 %v233, %v308
    %v310 = vpop.f32.mrb[0].mxu0
    %311 = vdwg.mxu0
    %312 = vmatprep.subr.mxu0 0.0
    %v313 = vand.u32 %v72, 4294901760
    %314 = vmatpush1.msra.mxu0 %v313
    %315 = vmatprep.subr.mxu0 0.0
    %v316 = vand.u32 %v73, 4294901760
    %317 = vmatpush1.msra.mxu0 %v316
    %318 = vmatprep.subr.mxu0 0.0
    %319 = vmatpush1.msra.mxu0 0.0
    %320 = vmatprep.subr.mxu0 0.0
    %321 = vmatpush1.msra.mxu0 0.0
    %322 = vmatprep.subr.mxu0 0.0
    %323 = vmatpush1.msra.mxu0 0.0
    %324 = vmatprep.subr.mxu0 0.0
    %325 = vmatpush1.msra.mxu0 0.0
    %326 = vmatprep.subr.mxu0 0.0
    %327 = vmatpush1.msra.mxu0 0.0
    %328 = vmatprep.subr.mxu0 0.0
    %329 = vmatpush1.msra.mxu0 0.0
    %330 = vmatprep.subr.mxu0 0.0
    %331 = vmatpush1.msra.mxu0 0.0
    %332 = vmatprep.subr.mxu0 0.0
    %333 = vmatpush1.msra.mxu0 0.0
    %334 = vmatprep.subr.mxu0 0.0
    %335 = vmatpush1.msra.mxu0 0.0
    %336 = vmatprep.subr.mxu0 0.0
    %337 = vmatpush1.msra.mxu0 0.0
    %338 = vmatprep.subr.mxu0 0.0
    %339 = vmatpush1.msra.mxu0 0.0
    %340 = vmatprep.subr.mxu0 0.0
    %341 = vmatpush1.msra.mxu0 0.0
    %342 = vmatprep.subr.mxu0 0.0
    %343 = vmatpush1.msra.mxu0 0.0
    %344 = vmatprep.subr.mxu0 0.0
    %345 = vmatpush1.msra.mxu0 0.0
    %346 = vmatprep.subr.mxu0 0.0
    %347 = vmatpush1.msra.mxu0 0.0
    %348 = vmatprep.subr.mxu0 0.0
    %349 = vmatpush1.msra.mxu0 0.0
    %350 = vmatprep.subr.mxu0 0.0
    %351 = vmatpush1.msra.mxu0 0.0
    %352 = vmatprep.subr.mxu0 0.0
    %353 = vmatpush1.msra.mxu0 0.0
    %354 = vmatprep.subr.mxu0 0.0
    %355 = vmatpush1.msra.mxu0 0.0
    %356 = vmatprep.subr.mxu0 0.0
    %357 = vmatpush1.msra.mxu0 0.0
    %358 = vmatprep.subr.mxu0 0.0
    %359 = vmatpush1.msra.mxu0 0.0
    %360 = vmatprep.subr.mxu0 0.0
    %361 = vmatpush1.msra.mxu0 0.0
    %362 = vmatprep.subr.mxu0 0.0
    %363 = vmatpush1.msra.mxu0 0.0
    %364 = vmatprep.subr.mxu0 0.0
    %365 = vmatpush1.msra.mxu0 0.0
    %366 = vmatprep.subr.mxu0 0.0
    %367 = vmatpush1.msra.mxu0 0.0
    %368 = vmatprep.subr.mxu0 0.0
    %369 = vmatpush1.msra.mxu0 0.0
    %370 = vmatprep.subr.mxu0 0.0
    %371 = vmatpush1.msra.mxu0 0.0
    %372 = vmatprep.subr.mxu0 0.0
    %373 = vmatpush1.msra.mxu0 0.0
    %374 = vmatprep.subr.mxu0 0.0
    %375 = vmatpush1.msra.mxu0 0.0
    %376 = vmatprep.subr.mxu0 0.0
    %377 = vmatpush1.msra.mxu0 0.0
    %378 = vmatprep.mubr.f32.mxu0 0.0
    %v379 = vand.u32 %v76, 4294901760
    %v380 = vsub.f32 %v76, %v379
    %v381 = vand.u32 %v380, 4294901760
    %382 = vmatmul.mubr.f32.gmra.mrb[0].mxu0 %v381
    %v383 = vpop.f32.mrb[0].mxu0
    %v384 = vadd.f32 %v309, %v383
    %v385 = vpop.f32.mrb[0].mxu0
    %386 = vdwg.mxu0
    %387 = vmatprep.subr.mxu0 0.0
    %v388 = vand.u32 %v72, 4294901760
    %v389 = vsub.f32 %v72, %v388
    %v390 = vand.u32 %v389, 4294901760
    %391 = vmatpush1.msra.mxu0 %v390
    %392 = vmatprep.subr.mxu0 0.0
    %v393 = vand.u32 %v73, 4294901760
    %v394 = vsub.f32 %v73, %v393
    %v395 = vand.u32 %v394, 4294901760
    %396 = vmatpush1.msra.mxu0 %v395
    %397 = vmatprep.subr.mxu0 0.0
    %398 = vmatpush1.msra.mxu0 0.0
    %399 = vmatprep.subr.mxu0 0.0
    %400 = vmatpush1.msra.mxu0 0.0
    %401 = vmatprep.subr.mxu0 0.0
    %402 = vmatpush1.msra.mxu0 0.0
    %403 = vmatprep.subr.mxu0 0.0
    %404 = vmatpush1.msra.mxu0 0.0
    %405 = vmatprep.subr.mxu0 0.0
    %406 = vmatpush1.msra.mxu0 0.0
    %407 = vmatprep.subr.mxu0 0.0
    %408 = vmatpush1.msra.mxu0 0.0
    %409 = vmatprep.subr.mxu0 0.0
    %410 = vmatpush1.msra.mxu0 0.0
    %411 = vmatprep.subr.mxu0 0.0
    %412 = vmatpush1.msra.mxu0 0.0
    %413 = vmatprep.subr.mxu0 0.0
    %414 = vmatpush1.msra.mxu0 0.0
    %415 = vmatprep.subr.mxu0 0.0
    %416 = vmatpush1.msra.mxu0 0.0
    %417 = vmatprep.subr.mxu0 0.0
    %418 = vmatpush1.msra.mxu0 0.0
    %419 = vmatprep.subr.mxu0 0.0
    %420 = vmatpush1.msra.mxu0 0.0
    %421 = vmatprep.subr.mxu0 0.0
    %422 = vmatpush1.msra.mxu0 0.0
    %423 = vmatprep.subr.mxu0 0.0
    %424 = vmatpush1.msra.mxu0 0.0
    %425 = vmatprep.subr.mxu0 0.0
    %426 = vmatpush1.msra.mxu0 0.0
    %427 = vmatprep.subr.mxu0 0.0
    %428 = vmatpush1.msra.mxu0 0.0
    %429 = vmatprep.subr.mxu0 0.0
    %430 = vmatpush1.msra.mxu0 0.0
    %431 = vmatprep.subr.mxu0 0.0
    %432 = vmatpush1.msra.mxu0 0.0
    %433 = vmatprep.subr.mxu0 0.0
    %434 = vmatpush1.msra.mxu0 0.0
    %435 = vmatprep.subr.mxu0 0.0
    %436 = vmatpush1.msra.mxu0 0.0
    %437 = vmatprep.subr.mxu0 0.0
    %438 = vmatpush1.msra.mxu0 0.0
    %439 = vmatprep.subr.mxu0 0.0
    %440 = vmatpush1.msra.mxu0 0.0
    %441 = vmatprep.subr.mxu0 0.0
    %442 = vmatpush1.msra.mxu0 0.0
    %443 = vmatprep.subr.mxu0 0.0
    %444 = vmatpush1.msra.mxu0 0.0
    %445 = vmatprep.subr.mxu0 0.0
    %446 = vmatpush1.msra.mxu0 0.0
    %447 = vmatprep.subr.mxu0 0.0
    %448 = vmatpush1.msra.mxu0 0.0
    %449 = vmatprep.subr.mxu0 0.0
    %450 = vmatpush1.msra.mxu0 0.0
    %451 = vmatprep.subr.mxu0 0.0
    %452 = vmatpush1.msra.mxu0 0.0
    %453 = vmatprep.subr.mxu0 0.0
    %454 = vmatpush1.msra.mxu0 0.0
    %455 = vmatprep.subr.mxu0 0.0
    %456 = vmatpush1.msra.mxu0 0.0
    %457 = vmatprep.mubr.f32.mxu0 0.0
    %v458 = vand.u32 %v76, 4294901760
    %459 = vmatmul.mubr.f32.gmra.mrb[0].mxu0 %v458
    %v460 = vpop.f32.mrb[0].mxu0
    %v461 = vadd.f32 %v384, %v460
    %v462 = vpop.f32.mrb[0].mxu0
    %463 = vdwg.mxu0
    %464 = vmatprep.subr.mxu0 0.0
    %v465 = vand.u32 %v72, 4294901760
    %466 = vmatpush1.msra.mxu0 %v465
    %467 = vmatprep.subr.mxu0 0.0
    %v468 = vand.u32 %v73, 4294901760
    %469 = vmatpush1.msra.mxu0 %v468
    %470 = vmatprep.subr.mxu0 0.0
    %471 = vmatpush1.msra.mxu0 0.0
    %472 = vmatprep.subr.mxu0 0.0
    %473 = vmatpush1.msra.mxu0 0.0
    %474 = vmatprep.subr.mxu0 0.0
    %475 = vmatpush1.msra.mxu0 0.0
    %476 = vmatprep.subr.mxu0 0.0
    %477 = vmatpush1.msra.mxu0 0.0
    %478 = vmatprep.subr.mxu0 0.0
    %479 = vmatpush1.msra.mxu0 0.0
    %480 = vmatprep.subr.mxu0 0.0
    %481 = vmatpush1.msra.mxu0 0.0
    %482 = vmatprep.subr.mxu0 0.0
    %483 = vmatpush1.msra.mxu0 0.0
    %484 = vmatprep.subr.mxu0 0.0
    %485 = vmatpush1.msra.mxu0 0.0
    %486 = vmatprep.subr.mxu0 0.0
    %487 = vmatpush1.msra.mxu0 0.0
    %488 = vmatprep.subr.mxu0 0.0
    %489 = vmatpush1.msra.mxu0 0.0
    %490 = vmatprep.subr.mxu0 0.0
    %491 = vmatpush1.msra.mxu0 0.0
    %492 = vmatprep.subr.mxu0 0.0
    %493 = vmatpush1.msra.mxu0 0.0
    %494 = vmatprep.subr.mxu0 0.0
    %495 = vmatpush1.msra.mxu0 0.0
    %496 = vmatprep.subr.mxu0 0.0
    %497 = vmatpush1.msra.mxu0 0.0
    %498 = vmatprep.subr.mxu0 0.0
    %499 = vmatpush1.msra.mxu0 0.0
    %500 = vmatprep.subr.mxu0 0.0
    %501 = vmatpush1.msra.mxu0 0.0
    %502 = vmatprep.subr.mxu0 0.0
    %503 = vmatpush1.msra.mxu0 0.0
    %504 = vmatprep.subr.mxu0 0.0
    %505 = vmatpush1.msra.mxu0 0.0
    %506 = vmatprep.subr.mxu0 0.0
    %507 = vmatpush1.msra.mxu0 0.0
    %508 = vmatprep.subr.mxu0 0.0
    %509 = vmatpush1.msra.mxu0 0.0
    %510 = vmatprep.subr.mxu0 0.0
    %511 = vmatpush1.msra.mxu0 0.0
    %512 = vmatprep.subr.mxu0 0.0
    %513 = vmatpush1.msra.mxu0 0.0
    %514 = vmatprep.subr.mxu0 0.0
    %515 = vmatpush1.msra.mxu0 0.0
    %516 = vmatprep.subr.mxu0 0.0
    %517 = vmatpush1.msra.mxu0 0.0
    %518 = vmatprep.subr.mxu0 0.0
    %519 = vmatpush1.msra.mxu0 0.0
    %520 = vmatprep.subr.mxu0 0.0
    %521 = vmatpush1.msra.mxu0 0.0
    %522 = vmatprep.subr.mxu0 0.0
    %523 = vmatpush1.msra.mxu0 0.0
    %524 = vmatprep.subr.mxu0 0.0
    %525 = vmatpush1.msra.mxu0 0.0
    %526 = vmatprep.subr.mxu0 0.0
    %527 = vmatpush1.msra.mxu0 0.0
    %528 = vmatprep.subr.mxu0 0.0
    %529 = vmatpush1.msra.mxu0 0.0
    %530 = vmatprep.mubr.f32.mxu0 0.0
    %v531 = vand.u32 %v76, 4294901760
    %532 = vmatmul.mubr.f32.gmra.mrb[0].mxu0 %v531
    %v533 = vpop.f32.mrb[0].mxu0
    %v534 = vadd.f32 %v461, %v533
    %v535 = vpop.f32.mrb[0].mxu0
    %536 = vdwg.mxu0
    %v537 = vld [vmem:[#allocation9] sm:$0x1]
    %s538 = sld [smem:[#allocation2]]
    %v539 = vld [vmem:[#allocation8] sm:$0xff]
    %v541 = vcombine.high %v539, %v539
    %v543 = vunpack.c.l.s4 1966171168
    %v544 = vunpack.c.0.s8 %v543
    %v545 = vlaneseq
    %v546 = vshrl.u32 %v545, 7
    %v547 = vsub.s32 %v544, %v546
    %v548 = vrot.slane %v539, %v547
    %v550 = vunpack.c.l.s4 1966171168
    %v551 = vunpack.c.0.s8 %v550
    %v552 = vlaneseq
    %v553 = vshrl.u32 %v552, 7
    %v554 = vsub.s32 %v551, %v553
    %v555 = vrot.slane %v541, %v554
    %v556 = vcombine.high %v548, %v548
    %v557 = vcombine.high %v555, %v555
    %v559 = vunpack.c.l.s4 1966171168
    %v560 = vunpack.c.0.s8 %v559
    %v561 = vlaneseq
    %v562 = vshrl.u32 %v561, 7
    %v563 = vsub.s32 %v560, %v562
    %v564 = vrot.slane %v548, %v563
    %v566 = vunpack.c.l.s4 1966171168
    %v567 = vunpack.c.0.s8 %v566
    %v568 = vlaneseq
    %v569 = vshrl.u32 %v568, 7
    %v570 = vsub.s32 %v567, %v569
    %v571 = vrot.slane %v555, %v570
    %v573 = vunpack.c.l.s4 1966171168
    %v574 = vunpack.c.0.s8 %v573
    %v575 = vlaneseq
    %v576 = vshrl.u32 %v575, 7
    %v577 = vsub.s32 %v574, %v576
    %v578 = vrot.slane %v556, %v577
    %v580 = vunpack.c.l.s4 1966171168
    %v581 = vunpack.c.0.s8 %v580
    %v582 = vlaneseq
    %v583 = vshrl.u32 %v582, 7
    %v584 = vsub.s32 %v581, %v583
    %v585 = vrot.slane %v557, %v584
    %v586 = vcombine.high %v564, %v564
    %v587 = vcombine.high %v571, %v571
    %v588 = vcombine.high %v578, %v578
    %v589 = vcombine.high %v585, %v585
    %v590 = vlaneseq
    %v591 = vshrl.u32 %v590, 7
    %v592 = vsub.s32 0, %v591
    %v593 = vrot.slane %v564, %v592
    %v594 = vlaneseq
    %v595 = vshrl.u32 %v594, 7
    %v596 = vsub.s32 0, %v595
    %v597 = vrot.slane %v578, %v596
    %v598 = vlaneseq
    %v599 = vshrl.u32 %v598, 7
    %v600 = vsub.s32 0, %v599
    %v601 = vrot.slane %v586, %v600
    %v602 = vlaneseq
    %v603 = vshrl.u32 %v602, 7
    %v604 = vsub.s32 0, %v603
    %v605 = vrot.slane %v588, %v604
    %v606 = vlaneseq
    %v607 = vshrl.u32 %v606, 7
    %v608 = vsub.s32 0, %v607
    %v609 = vrot.slane %v571, %v608
    %v610 = vlaneseq
    %v611 = vshrl.u32 %v610, 7
    %v612 = vsub.s32 0, %v611
    %v613 = vrot.slane %v585, %v612
    %v614 = vlaneseq
    %v615 = vshrl.u32 %v614, 7
    %v616 = vsub.s32 0, %v615
    %v617 = vrot.slane %v587, %v616
    %v618 = vlaneseq
    %v619 = vshrl.u32 %v618, 7
    %v620 = vsub.s32 0, %v619
    %v621 = vrot.slane %v589, %v620
    %v630 = vadd.f32 %v593, %v534
    %v631 = vadd.f32 %v597, %v534
    %v632 = vadd.f32 %v601, %v534
    %v633 = vadd.f32 %v605, %v534
    %v634 = vadd.f32 %v609, %v534
    %v635 = vadd.f32 %v613, %v534
    %v636 = vadd.f32 %v617, %v534
    %v637 = vadd.f32 %v621, %v534
    %v638 = vmax.f32 %v630, 0.0
    %v639 = vmax.f32 %v631, 0.0
    %v640 = vmax.f32 %v632, 0.0
    %v641 = vmax.f32 %v633, 0.0
    %v642 = vmax.f32 %v634, 0.0
    %v643 = vmax.f32 %v635, 0.0
    %v644 = vmax.f32 %v636, 0.0
    %v645 = vmax.f32 %v637, 0.0
    %v647 = vlaneseq
    %v648 = vshrl.u32 %v647, 7
    %v649 = vsub.s32 0, %v648
    %v650 = vrot.slane %v537, %v649
    %v652 = vmul.f32 %v638, %v650
    %v653 = vmul.f32 %v639, %v650
    %v654 = vmul.f32 %v640, %v650
    %v655 = vmul.f32 %v641, %v650
    %v656 = vmul.f32 %v642, %v650
    %v657 = vmul.f32 %v643, %v650
    %v658 = vmul.f32 %v644, %v650
    %v659 = vmul.f32 %v645, %v650
    %vm660 = vcmask 254976
    %v661 = vsel %vm660, %v652, 0.0
    %662 = vadd.xlane.f32.xlu0 %v661
    %v663 = vpop.xlane.xlu0 %662
    %v664 = vsel %vm660, %v653, 0.0
    %665 = vadd.xlane.f32.xlu0 %v664
    %v666 = vpop.xlane.xlu0 %665
    %v667 = vsel %vm660, %v654, 0.0
    %668 = vadd.xlane.f32.xlu0 %v667
    %v669 = vpop.xlane.xlu0 %668
    %v670 = vsel %vm660, %v655, 0.0
    %671 = vadd.xlane.f32.xlu0 %v670
    %v672 = vpop.xlane.xlu0 %671
    %v673 = vsel %vm660, %v656, 0.0
    %674 = vadd.xlane.f32.xlu0 %v673
    %v675 = vpop.xlane.xlu0 %674
    %v676 = vsel %vm660, %v657, 0.0
    %677 = vadd.xlane.f32.xlu0 %v676
    %v678 = vpop.xlane.xlu0 %677
    %v679 = vsel %vm660, %v658, 0.0
    %680 = vadd.xlane.f32.xlu0 %v679
    %v681 = vpop.xlane.xlu0 %680
    %v682 = vsel %vm660, %v659, 0.0
    %683 = vadd.xlane.f32.xlu0 %v682
    %v684 = vpop.xlane.xlu0 %683
    %v685 = vstv %s538
    %v686 = vadd.f32 %v663, %v685
    %v687 = vadd.f32 %v666, %v685
    %v688 = vadd.f32 %v669, %v685
    %v689 = vadd.f32 %v672, %v685
    %v690 = vadd.f32 %v675, %v685
    %v691 = vadd.f32 %v678, %v685
    %v692 = vadd.f32 %v681, %v685
    %v693 = vadd.f32 %v684, %v685
    %v702 = vlaneseq
    %v703 = vand.u32 %v702, 127
    %v704 = vlaneseq
    %v705 = vshrl.u32 %v704, 7
    %v706 = vsub.s32 %v703, %v705
    %v707 = vrot.slane %v686, %v706
    %v708 = vlaneseq
    %v709 = vshrl.u32 %v708, 7
    %v710 = vsub.s32 %v703, %v709
    %v711 = vrot.slane %v687, %v710
    %v712 = vlaneseq
    %v713 = vshrl.u32 %v712, 7
    %v714 = vsub.s32 %v703, %v713
    %v715 = vrot.slane %v688, %v714
    %v716 = vlaneseq
    %v717 = vshrl.u32 %v716, 7
    %v718 = vsub.s32 %v703, %v717
    %v719 = vrot.slane %v689, %v718
    %v720 = vlaneseq
    %v721 = vshrl.u32 %v720, 7
    %v722 = vsub.s32 %v703, %v721
    %v723 = vrot.slane %v690, %v722
    %v724 = vlaneseq
    %v725 = vshrl.u32 %v724, 7
    %v726 = vsub.s32 %v703, %v725
    %v727 = vrot.slane %v691, %v726
    %v728 = vlaneseq
    %v729 = vshrl.u32 %v728, 7
    %v730 = vsub.s32 %v703, %v729
    %v731 = vrot.slane %v692, %v730
    %v732 = vlaneseq
    %v733 = vshrl.u32 %v732, 7
    %v734 = vsub.s32 %v703, %v733
    %v735 = vrot.slane %v693, %v734
    %vm736 = vcmask 1041409
    %v737 = vsel %vm736, %v711, %v707
    %vm738 = vcmask 1042434
    %v739 = vsel %vm738, %v715, %v737
    %vm740 = vcmask 1043459
    %v741 = vsel %vm740, %v719, %v739
    %vm742 = vcmask 1044484
    %v743 = vsel %vm742, %v723, %v741
    %vm744 = vcmask 1045509
    %v745 = vsel %vm744, %v727, %v743
    %vm746 = vcmask 1046534
    %v747 = vsel %vm746, %v731, %v745
    %vm748 = vcmask 1047559
    %v749 = vsel %vm748, %v735, %v747
    %vm751 = vcmask 15360
    %752 = vst.msk [vmem:[#allocation11] sm:$0xff] %vm751, %v749
    // Predicated region
    $region38: #{tpu_custom_call.1} parent=1 // pred_check
      _
    $region39: #{tpu_custom_call.1} parent=1 // pred_check_branch
      %754 = sbr.rel (0) target = $region41
    $region40: #{tpu_custom_call.1} parent=1 // pred_region
      %s756 = ssub.s32 128, 128
      %757 = vsyncadd [#allocation5], %s756
      %s759 = sshll.u32 [#allocation11], 4
      %s760 = int_to_ptr.vmem [resolvable:$true] %s759
      %762 = dma.vmem_to_hbm [thread:$0]  %s760, 128, %s5, [#allocation5]
    $region41: #{tpu_custom_call.1} parent=1 // pred_fallthru
      _
    // Predicated region
    $region42: #{tpu_custom_call.1} parent=1 // pred_check
      _
    $region43: #{tpu_custom_call.1} parent=1 // pred_check_branch
      %764 = sbr.rel (0) target = $region45
    $region44: #{tpu_custom_call.1} parent=1 // pred_region
      %765 = dma.done [#allocation5], 128
    $region45: #{tpu_custom_call.1} parent=1 // pred_fallthru
      _
    %766 = vsyncpa [#allocation4], 1
    %767 = vsyncpa [#allocation7], 1
    %768 = vsyncpa [#allocation10], 1
    %769 = vsyncpa [#allocation5], 1

</llo_original>
